<compile_context>
chip_gen: v7x
topology: tpu7x:2x2x1
jax: 0.10.0
libtpu: 0.0.40
codegen_flags: <defaults>
</compile_context>

<pallas_src>
import jax
import jax.numpy as jnp
from jax.experimental import pallas as pl
from jax.experimental.pallas import tpu as pltpu


def _rbf_eval_kernel(xs_ref, x2h_ref, zt_ref, z2h_ref, o_ref):
    # (TN, D) @ (D, TM) on the MXU; both operands were pre-scaled by
    # 1/lengthscale in the wrapper.
    xz = jnp.dot(xs_ref[...], zt_ref[...], preferred_element_type=jnp.float32)
    # -0.5*||x - z||^2 = x.z - 0.5*||x||^2 - 0.5*||z||^2 ; clamp at 0 so the
    # result never exceeds exp(0) = 1 despite f32 rounding in the expansion.
    arg = jnp.minimum(xz - x2h_ref[...] - z2h_ref[...], 0.0)
    o_ref[...] = jnp.exp(arg).astype(o_ref.dtype)


def _round_up(v, m):
    return ((v + m - 1) // m) * m


def _vmem_footprint_bytes(tn, tm, d):
    """Approximate double-buffered f32 VMEM footprint of one grid step."""
    per_buf = (
        tn * tm                      # output tile
        + tn * _round_up(d, 128)     # scaled x tile (lane-padded D)
        + tn * 128                   # 0.5*||x||^2 column (lane-padded)
        + _round_up(d, 8) * tm       # scaled points^T tile (sublane-padded D)
        + 8 * tm                     # 0.5*||z||^2 row (sublane-padded)
    )
    return 2 * 4 * per_buf           # double-buffered, 4 bytes/elem


def kernel_evaluation_map(x, points, lengthscale, *, tn=512, tm=2048,
                          out_dtype=jnp.float32):
    """Pallas implementation of KernelEvaluationMap.forward for an ARD RBF kernel.

    Args:
      x:            (N, D) query inputs.
      points:       (M, D) centering points (kernel's second argument).
      lengthscale:  (1, D) ARD lengthscale.
      tn, tm:       output tile sizes along N (multiple of 8) and M (multiple
                    of 128); clamped to the full extent for small problems and
                    shrunk to fit a generation-aware VMEM budget.
      out_dtype:    output dtype (f32 default; bf16 halves writeback traffic
                    on writeback-bound v5e/v6e if downstream accumulates f32).

    Returns:
      K: (N, M) kernel matrix k(x, points).
    """
    N, D = x.shape
    M, _ = points.shape

    # ---- tile-size selection -------------------------------------------------
    # Clamp to the full extent for small problems (full-extent blocks are
    # exempt from the (8, 128) divisibility rule).
    tn = N if N <= tn else tn   # multiple of 8 when actually tiling
    tm = M if M <= tm else tm   # multiple of 128 when actually tiling

    # Guarantee >= 2 grid blocks along one "parallel" axis when possible, so
    # multi-TensorCore parts (v7x: 2 TCs/chip) can shard the grid.
    if pl.cdiv(M, tm) == 1 and pl.cdiv(N, tn) == 1:
        if M >= 256:
            tm = _round_up(pl.cdiv(M, 2), 128)
        elif N >= 16:
            tn = _round_up(pl.cdiv(N, 2), 8)

    # Generation-aware VMEM budget: v5e/v6e have 128 MiB physical VMEM,
    # v7x only 64 MiB.  Leave headroom for the pipeline and misc scratch.
    try:
        vmem_capacity = pltpu.get_tpu_info().vmem_capacity_bytes
    except Exception:  # interpret mode / query unavailable: assume v7x-sized
        vmem_capacity = 64 << 20
    budget = min(int(vmem_capacity * 3 // 4), 96 << 20)

    # Shrink tiles (M first, then N) until the double-buffered footprint fits.
    while _vmem_footprint_bytes(tn, tm, D) > budget and tm > 128:
        tm = max(128, _round_up(tm // 2, 128))
    while _vmem_footprint_bytes(tn, tm, D) > budget and tn > 8:
        tn = max(8, _round_up(tn // 2, 8))

    # Grid: points (M) tile outer, x (N) tile inner -> z-side operands stay
    # resident across the inner loop (no re-DMA per step).
    grid = (pl.cdiv(M, tm), pl.cdiv(N, tn))

    # ---- one-time hoisted prep (O(N*D + M*D), negligible vs N*M output) ------
    inv_ls = (1.0 / lengthscale).astype(jnp.float32)                 # (1, D)
    xs = x.astype(jnp.float32) * inv_ls                              # (N, D)
    x2h = 0.5 * jnp.sum(xs * xs, axis=-1, keepdims=True)             # (N, 1)
    zs = points.astype(jnp.float32) * inv_ls                         # (M, D)
    zt = zs.T                                                        # (D, M)
    z2h = 0.5 * jnp.sum(zs * zs, axis=-1, keepdims=True).T           # (1, M)

    # TODO(synk): for large D (> few hundred) add a K ("arbitrary") grid axis
    # over D with an f32 VMEM accumulator instead of whole-D operand tiles.
    n_m_tiles = pl.cdiv(M, tm)
    cost = pl.CostEstimate(
        flops=2 * N * M * D + 3 * N * M,
        transcendentals=N * M,
        bytes_accessed=4 * (n_m_tiles * (N * D + N) + M * D + M)
        + jnp.dtype(out_dtype).itemsize * N * M,
    )

    return pl.pallas_call(
        _rbf_eval_kernel,
        out_shape=jax.ShapeDtypeStruct((N, M), out_dtype),
        grid=grid,
        in_specs=[
            pl.BlockSpec((tn, D), lambda j, i: (i, 0)),   # scaled x tile (inner axis)
            pl.BlockSpec((tn, 1), lambda j, i: (i, 0)),   # 0.5*||x||^2 column
            pl.BlockSpec((D, tm), lambda j, i: (0, j)),   # scaled points^T tile (outer axis)
            pl.BlockSpec((1, tm), lambda j, i: (0, j)),   # 0.5*||z||^2 row
        ],
        out_specs=pl.BlockSpec((tn, tm), lambda j, i: (i, j)),
        compiler_params=pltpu.CompilerParams(
            dimension_semantics=("parallel", "parallel"),
            vmem_limit_bytes=budget,
        ),
        cost_estimate=cost,
    )(xs, x2h, zt, z2h)


def _reference(x, points, lengthscale):
    xs = x / lengthscale
    zs = points / lengthscale
    sq = jnp.sum((xs[:, None, :] - zs[None, :, :]) ** 2, axis=-1)
    return jnp.exp(-0.5 * sq)


if __name__ == "__main__":
    key = jax.random.PRNGKey(0)
    kx, kp = jax.random.split(key)

    # x: (N, D); points: (M, D); output: (N, M).
    N, M, D = 72, 256, 6
    x = jax.random.normal(kx, (N, D), dtype=jnp.float32)
    points = jax.random.normal(kp, (M, D), dtype=jnp.float32)
    # Deterministic kernel parameter init (shape (1, D), as in ARD RBFKernel).
    lengthscale = 0.5 + 0.1 * jnp.arange(1, D + 1, dtype=jnp.float32).reshape(1, D)

    ref = _reference(x, points, lengthscale)

    # Default (large) tiles: clamped to the full extent, then split along M so
    # the grid has >= 2 blocks for multi-TC parts.
    out_default = kernel_evaluation_map(x, points, lengthscale)
    jax.block_until_ready(out_default)
    assert out_default.shape == (N, M)
    assert jnp.allclose(out_default, ref, atol=2e-5, rtol=1e-5)

    # Small tiles: exercises a real 2D grid, a resident points tile across the
    # inner N loop, and a masked partial edge tile along N (72 = 32+32+8).
    out_small = kernel_evaluation_map(x, points, lengthscale, tn=32, tm=128)
    jax.block_until_ready(out_small)
    assert out_small.shape == (N, M)
    assert jnp.allclose(out_small, ref, atol=2e-5, rtol=1e-5)

    print("KERNEL_OK")
</pallas_src>

<mosaic_0001>
module attributes {stable_mosaic.version = 11 : i64} {
  func.func @_rbf_eval_kernel(%arg0: i32, %arg1: i32, %arg2: memref<72x6xf32, #tpu.memory_space<vmem>>, %arg3: memref<72x1xf32, #tpu.memory_space<vmem>>, %arg4: memref<6x128xf32, #tpu.memory_space<vmem>>, %arg5: memref<1x128xf32, #tpu.memory_space<vmem>>, %arg6: memref<72x128xf32, #tpu.memory_space<vmem>>) attributes {dimension_semantics = [#tpu.dimension_semantics<parallel>, #tpu.dimension_semantics<parallel>], iteration_bounds = array<i64: 2, 1>, scalar_prefetch = 0 : i64, scratch_operands = 0 : i64, tpu.core_type = #tpu.core_type<tc>, window_params = [{transform_indices = @transform_0, window_bounds = array<i64: 72, 6>}, {transform_indices = @transform_1, window_bounds = array<i64: 72, 1>}, {transform_indices = @transform_2, window_bounds = array<i64: 6, 128>}, {transform_indices = @transform_3, window_bounds = array<i64: 1, 128>}, {transform_indices = @transform_4, window_bounds = array<i64: 72, 128>}]} {
    %c0 = arith.constant 0 : index
    %c0_0 = arith.constant 0 : index
    %0 = vector.load %arg2[%c0, %c0_0] : memref<72x6xf32, #tpu.memory_space<vmem>>, vector<72x6xf32>
    %c0_1 = arith.constant 0 : index
    %c0_2 = arith.constant 0 : index
    %1 = vector.load %arg4[%c0_1, %c0_2] : memref<6x128xf32, #tpu.memory_space<vmem>>, vector<6x128xf32>
    %cst = arith.constant dense<0.000000e+00> : vector<72x128xf32>
    %2 = tpu.matmul %0, %1, %cst {dimension_numbers = #tpu.dot_dimension_numbers<[1], [0], [0], [1], [0, 0, 1, 1], [], []>} : vector<72x6xf32>, vector<6x128xf32>, vector<72x128xf32> -> vector<72x128xf32>
    %c0_3 = arith.constant 0 : index
    %c0_4 = arith.constant 0 : index
    %3 = vector.load %arg3[%c0_3, %c0_4] : memref<72x1xf32, #tpu.memory_space<vmem>>, vector<72x1xf32>
    %4 = vector.broadcast %3 : vector<72x1xf32> to vector<72x128xf32>
    %5 = arith.subf %2, %4 : vector<72x128xf32>
    %c0_5 = arith.constant 0 : index
    %c0_6 = arith.constant 0 : index
    %6 = vector.load %arg5[%c0_5, %c0_6] : memref<1x128xf32, #tpu.memory_space<vmem>>, vector<1x128xf32>
    %7 = vector.broadcast %6 : vector<1x128xf32> to vector<72x128xf32>
    %8 = arith.subf %5, %7 : vector<72x128xf32>
    %cst_7 = arith.constant 0.000000e+00 : f32
    %9 = vector.broadcast %cst_7 : f32 to vector<72x128xf32>
    %10 = arith.minimumf %8, %9 : vector<72x128xf32>
    %11 = math.exp %10 : vector<72x128xf32>
    %c0_8 = arith.constant 0 : index
    %c0_9 = arith.constant 0 : index
    %12 = vector.load %arg6[%c0_8, %c0_9] : memref<72x128xf32, #tpu.memory_space<vmem>>, vector<72x128xf32>
    tpu.vector_store %arg6[%c0_8, %c0_9], %11 {strides = array<i32>} : memref<72x128xf32, #tpu.memory_space<vmem>>, vector<72x128xf32>,
    return
  }
  func.func @transform_0(%arg0: i32, %arg1: i32) -> (i32, i32) {
    %c0_i32 = arith.constant 0 : i32
    %c0_i32_0 = arith.constant 0 : i32
    return %arg1, %c0_i32 : i32, i32
  }
  func.func @transform_1(%arg0: i32, %arg1: i32) -> (i32, i32) {
    %c0_i32 = arith.constant 0 : i32
    %c0_i32_0 = arith.constant 0 : i32
    return %arg1, %c0_i32 : i32, i32
  }
  func.func @transform_2(%arg0: i32, %arg1: i32) -> (i32, i32) {
    %c0_i32 = arith.constant 0 : i32
    %c0_i32_0 = arith.constant 0 : i32
    return %c0_i32, %arg0 : i32, i32
  }
  func.func @transform_3(%arg0: i32, %arg1: i32) -> (i32, i32) {
    %c0_i32 = arith.constant 0 : i32
    %c0_i32_0 = arith.constant 0 : i32
    return %c0_i32, %arg0 : i32, i32
  }
  func.func @transform_4(%arg0: i32, %arg1: i32) -> (i32, i32) {
    %c0_i32 = arith.constant 0 : i32
    return %arg1, %arg0 : i32, i32
  }
}

</mosaic_0001>

<llo_original>
// kernel: tpu_custom_call.1
$region0: #{tpu_custom_call.1}
  #allocation0 [shape = 'u32[]', space=smem, size = 0x4, offset = 0x4, fixed_abs, tag = 'smem constant byte address 0x4 - core index']
  #allocation1 [shape = 'u32[144,128]{1,0:T(1,128)}', space=vmem, size = 0x12000, scoped, tag = 'internal scratch']
  %s0 = inlined_call_operand.vmem [shape: f32[72,6], index: 0, kind: input, shape index: {}]
  %s1 = inlined_call_operand.vmem [shape: f32[72,1], index: 1, kind: input, shape index: {}]
  %s2 = inlined_call_operand.vmem [shape: f32[6,256], index: 2, kind: input, shape index: {}]
  %s3 = inlined_call_operand.vmem [shape: f32[1,256], index: 3, kind: input, shape index: {}]
  %s4 = inlined_call_operand.hbm [shape: f32[72,256], index: 4, kind: output, shape index: {}]
  %s5 = sld [smem:[#allocation0]]
  $region49: #{tpu_custom_call.1} parent=0
    _
  %s7 = ssub.s32 1, %s5
  %s8 = scalar_select 0, %s7, %s5
  $region1: #{tpu_custom_call.1} parent=0
    #allocation2 [shape = 'u8[73728]{0}', space=vmem, size = 0x12000, scoped, tag = 'output window, operand 0']
    #allocation3 [shape = 's32[2]{0}', space=sflag, size = 0x8, scoped, tag = 'scoped memory for tpu_custom_call.1']
    %9 = vsyncpa [#allocation3], 0
    %s10 = scalar_lea.sflag [#allocation3], 1
    %11 = vsyncpa %s10, 0
    loop: start=0, step=1, limit=4
    $region2: #{tpu_custom_call.1} parent=1 // loop_pre_header
      _
    $region3: #{tpu_custom_call.1} parent=1 // loop_header
      %s13 = sphi 0, %s17
      %p14 = scmp.ge.s32.totalorder %s13, 4
      %s20 = sphi 0, %s32
      %s21 = sphi 0, %s28
      %s22 = sphi 0, %s20
      %s23 = sphi 0, %s21
      %s24 = sphi 0, %s22
      %s25 = sphi 0, %s23
      %s35 = sphi 0, %s37
      %s38 = sphi 0, %s35
      %s39 = sphi 0, %s38
      %s55 = sphi 0, %s39
      %s61 = sphi 0, %s63
      %s64 = sphi 0, %s61
      %s65 = sphi 0, %s64
      %s81 = sphi 0, %s65
      %s87 = sphi 0, %s89
      %s90 = sphi 0, %s87
      %s91 = sphi 0, %s90
      %s107 = sphi 0, %s91
      %s113 = sphi 0, %s115
      %s116 = sphi 0, %s113
      %s117 = sphi 0, %s116
      %s133 = sphi 0, %s117
      %s141 = sphi 0, %s143
      %s144 = sphi 0, %s141
      %s145 = sphi 0, %s144
      %s161 = sphi 0, %s145
    $region4: #{tpu_custom_call.1} parent=1 // loop_header_branch
      %16 = sbr.rel (%p14) target = $region8
    $region5: #{tpu_custom_call.1} parent=1 // loop_body
      %s18 = ssub.s32 %s13, 1
      %s19 = ssub.s32 %s13, 2
      %s26 = sadd.s32 1, %s21
      %p27 = scmp.ge.s32.totalorder %s26, 1
      %s28 = scalar_select %p27, 0, %s26
      %s29 = sadd.s32 1, %s20
      %s30 = scalar_select %p27, %s29, %s20
      %p31 = scmp.ge.s32.totalorder %s30, 2
      %s32 = scalar_select %p31, 0, %s30
      %s33 = ssub.s32 %s21, %s28
      %p34 = scmp.eq.s32.totalorder %s33, 0
      %s36 = sadd.s32 %s35, 1
      %s37 = scalar_select %p34, %s35, %s36
      %p40 = pneg %p34
      %p41 = scmp.eq.s32.totalorder %s13, 1
      %p42 = por %p40, %p41
      %p43 = scmp.ne.s32.totalorder %s35, %s38
      %p44 = scmp.eq.s32.totalorder %s13, 0
      %p45 = por %p43, %p44
      %p46 = scmp.ne.s32.totalorder %s35, %s38
      %p47 = scmp.eq.s32.totalorder %s18, 1
      %p48 = por %p46, %p47
      %p49 = scmp.ne.s32.totalorder %s38, %s39
      %p50 = scmp.eq.s32.totalorder %s18, 0
      %p51 = por %p49, %p50
      %p52 = scmp.ne.s32.totalorder %s38, %s39
      %p53 = scmp.eq.s32.totalorder %s19, 1
      %p54 = por %p52, %p53
      %p56 = scmp.ne.s32.totalorder %s39, %s55
      %p57 = scmp.eq.s32.totalorder %s19, 0
      %p58 = por %p56, %p57
      %s59 = ssub.s32 %s21, %s28
      %p60 = scmp.eq.s32.totalorder %s59, 0
      %s62 = sadd.s32 %s61, 1
      %s63 = scalar_select %p60, %s61, %s62
      %p66 = pneg %p60
      %p67 = scmp.eq.s32.totalorder %s13, 1
      %p68 = por %p66, %p67
      %p69 = scmp.ne.s32.totalorder %s61, %s64
      %p70 = scmp.eq.s32.totalorder %s13, 0
      %p71 = por %p69, %p70
      %p72 = scmp.ne.s32.totalorder %s61, %s64
      %p73 = scmp.eq.s32.totalorder %s18, 1
      %p74 = por %p72, %p73
      %p75 = scmp.ne.s32.totalorder %s64, %s65
      %p76 = scmp.eq.s32.totalorder %s18, 0
      %p77 = por %p75, %p76
      %p78 = scmp.ne.s32.totalorder %s64, %s65
      %p79 = scmp.eq.s32.totalorder %s19, 1
      %p80 = por %p78, %p79
      %p82 = scmp.ne.s32.totalorder %s65, %s81
      %p83 = scmp.eq.s32.totalorder %s19, 0
      %p84 = por %p82, %p83
      %s85 = ssub.s32 %s20, %s32
      %p86 = scmp.eq.s32.totalorder %s85, 0
      %s88 = sadd.s32 %s87, 1
      %s89 = scalar_select %p86, %s87, %s88
      %p92 = pneg %p86
      %p93 = scmp.eq.s32.totalorder %s13, 1
      %p94 = por %p92, %p93
      %p95 = scmp.ne.s32.totalorder %s87, %s90
      %p96 = scmp.eq.s32.totalorder %s13, 0
      %p97 = por %p95, %p96
      %p98 = scmp.ne.s32.totalorder %s87, %s90
      %p99 = scmp.eq.s32.totalorder %s18, 1
      %p100 = por %p98, %p99
      %p101 = scmp.ne.s32.totalorder %s90, %s91
      %p102 = scmp.eq.s32.totalorder %s18, 0
      %p103 = por %p101, %p102
      %p104 = scmp.ne.s32.totalorder %s90, %s91
      %p105 = scmp.eq.s32.totalorder %s19, 1
      %p106 = por %p104, %p105
      %p108 = scmp.ne.s32.totalorder %s91, %s107
      %p109 = scmp.eq.s32.totalorder %s19, 0
      %p110 = por %p108, %p109
      %s111 = ssub.s32 %s20, %s32
      %p112 = scmp.eq.s32.totalorder %s111, 0
      %s114 = sadd.s32 %s113, 1
      %s115 = scalar_select %p112, %s113, %s114
      %p118 = pneg %p112
      %p119 = scmp.eq.s32.totalorder %s13, 1
      %p120 = por %p118, %p119
      %p121 = scmp.ne.s32.totalorder %s113, %s116
      %p122 = scmp.eq.s32.totalorder %s13, 0
      %p123 = por %p121, %p122
      %p124 = scmp.ne.s32.totalorder %s113, %s116
      %p125 = scmp.eq.s32.totalorder %s18, 1
      %p126 = por %p124, %p125
      %p127 = scmp.ne.s32.totalorder %s116, %s117
      %p128 = scmp.eq.s32.totalorder %s18, 0
      %p129 = por %p127, %p128
      %p130 = scmp.ne.s32.totalorder %s116, %s117
      %p131 = scmp.eq.s32.totalorder %s19, 1
      %p132 = por %p130, %p131
      %p134 = scmp.ne.s32.totalorder %s117, %s133
      %p135 = scmp.eq.s32.totalorder %s19, 0
      %p136 = por %p134, %p135
      %s137 = ssub.s32 %s21, %s28
      %s138 = ssub.s32 %s20, %s32
      %s139 = sor.u32 %s137, %s138
      %p140 = scmp.eq.s32.totalorder %s139, 0
      %s142 = sadd.s32 %s141, 1
      %s143 = scalar_select %p140, %s141, %s142
      %p146 = pneg %p140
      %p147 = scmp.eq.s32.totalorder %s13, 1
      %p148 = por %p146, %p147
      %p149 = scmp.ne.s32.totalorder %s141, %s144
      %p150 = scmp.eq.s32.totalorder %s13, 0
      %p151 = por %p149, %p150
      %p152 = scmp.ne.s32.totalorder %s141, %s144
      %p153 = scmp.eq.s32.totalorder %s18, 1
      %p154 = por %p152, %p153
      %p155 = scmp.ne.s32.totalorder %s144, %s145
      %p156 = scmp.eq.s32.totalorder %s18, 0
      %p157 = por %p155, %p156
      %p158 = scmp.ne.s32.totalorder %s144, %s145
      %p159 = scmp.eq.s32.totalorder %s19, 1
      %p160 = por %p158, %p159
      %p162 = scmp.ne.s32.totalorder %s145, %s161
      %p163 = scmp.eq.s32.totalorder %s19, 0
      %p164 = por %p162, %p163
      %p165 = scmp.le.s32.totalorder 1, %s13
      %p166 = scmp.lt.s32.totalorder %s13, 3
      %p167 = pnand %p165, %p166
      %p168 = pneg %p167
      // Predicated region
      $region9: #{tpu_custom_call.1} parent=5 // pred_check
        _
      $region10: #{tpu_custom_call.1} parent=5 // pred_check_branch
        %170 = sbr.rel (%p167) target = $region12
      $region11: #{tpu_custom_call.1} parent=5 // pred_region
        %s171 = ssub.s32 %s13, 1
        // Predicated region
        $region13: #{tpu_custom_call.1} parent=11 // pred_check
          %p172 = pneg %p51
        $region14: #{tpu_custom_call.1} parent=11 // pred_check_branch
          %174 = sbr.rel (%p172) target = $region16
        $region15: #{tpu_custom_call.1} parent=11 // pred_region
          %s175 = smul.u32 9, %s23
          %p176 = scmp.lt.s32.totalorder %s175, 8
          %s177 = scalar_select %p176, %s175, 8
          %s178 = smul.addr %s177, 8
          %s179 = scalar_lea.vmem %s0, %s178
          %s180 = smul.u32 9, %s23
        $region16: #{tpu_custom_call.1} parent=11 // pred_fallthru
          _
        // Predicated region
        $region17: #{tpu_custom_call.1} parent=11 // pred_check
          %p181 = pneg %p77
        $region18: #{tpu_custom_call.1} parent=11 // pred_check_branch
          %183 = sbr.rel (%p181) target = $region20
        $region19: #{tpu_custom_call.1} parent=11 // pred_region
          %s184 = smul.u32 9, %s23
          %p185 = scmp.lt.s32.totalorder %s184, 8
          %s186 = scalar_select %p185, %s184, 8
          %s187 = smul.addr %s186, 8
          %s188 = scalar_lea.vmem %s1, %s187
          %s189 = smul.u32 9, %s23
        $region20: #{tpu_custom_call.1} parent=11 // pred_fallthru
          _
      $region12: #{tpu_custom_call.1} parent=5 // pred_fallthru
        _
      %p190 = scmp.lt.s32.totalorder %s13, 2
      // Predicated region
      $region21: #{tpu_custom_call.1} parent=5 // pred_check
        %p191 = pneg %p190
      $region22: #{tpu_custom_call.1} parent=5 // pred_check_branch
        %193 = sbr.rel (%p191) target = $region24
      $region23: #{tpu_custom_call.1} parent=5 // pred_region
        // Predicated region
        $region25: #{tpu_custom_call.1} parent=23 // pred_check
          %p194 = pneg %p97
        $region26: #{tpu_custom_call.1} parent=23 // pred_check_branch
          %196 = sbr.rel (%p194) target = $region28
        $region27: #{tpu_custom_call.1} parent=23 // pred_region
          %p197 = scmp.lt.s32.totalorder %s20, 1
          %s198 = scalar_select %p197, %s20, 1
          %s199 = smul.addr %s198, 8
          %s200 = scalar_lea.vmem %s2, %s199
        $region28: #{tpu_custom_call.1} parent=23 // pred_fallthru
          _
        // Predicated region
        $region29: #{tpu_custom_call.1} parent=23 // pred_check
          %p201 = pneg %p123
        $region30: #{tpu_custom_call.1} parent=23 // pred_check_branch
          %203 = sbr.rel (%p201) target = $region32
        $region31: #{tpu_custom_call.1} parent=23 // pred_region
          %p204 = scmp.lt.s32.totalorder %s20, 1
          %s205 = scalar_select %p204, %s20, 1
          %s206 = scalar_lea.vmem %s3, %s205
        $region32: #{tpu_custom_call.1} parent=23 // pred_fallthru
          _
      $region24: #{tpu_custom_call.1} parent=5 // pred_fallthru
        _
      %p207 = scmp.le.s32.totalorder 1, %s13
      %p208 = scmp.lt.s32.totalorder %s13, 3
      %p209 = pnand %p207, %p208
      %p210 = pneg %p209
      // Predicated region
      $region33: #{tpu_custom_call.1} parent=5 // pred_check
        _
      $region34: #{tpu_custom_call.1} parent=5 // pred_check_branch
        %212 = sbr.rel (%p209) target = $region36
      $region35: #{tpu_custom_call.1} parent=5 // pred_region
        %s213 = ssub.s32 %s13, 1
        %s214 = smul.u32 9, %s23
        %p215 = scmp.lt.s32.totalorder %s214, 8
        %s216 = scalar_select %p215, %s214, 8
        %s217 = smul.addr %s216, 8
        %s218 = scalar_lea.vmem %s0, %s217
        %p219 = pneg %p51
        %p220 = pneg %p48
        %s221 = smul.u32 9, %s23
        %p222 = scmp.lt.s32.totalorder %s221, 8
        %s223 = scalar_select %p222, %s221, 8
        %s224 = smul.addr %s223, 8
        %s225 = scalar_lea.vmem %s1, %s224
        %p226 = pneg %p77
        %p227 = pneg %p74
        %p228 = scmp.lt.s32.totalorder %s22, 1
        %s229 = scalar_select %p228, %s22, 1
        %s230 = smul.addr %s229, 8
        %s231 = scalar_lea.vmem %s2, %s230
        %p232 = pneg %p103
        %p233 = pneg %p100
        %p234 = scmp.lt.s32.totalorder %s22, 1
        %s235 = scalar_select %p234, %s22, 1
        %s236 = scalar_lea.vmem %s3, %s235
        %p237 = pneg %p129
        %p238 = pneg %p126
        %p239 = pneg %p157
        %p240 = pneg %p154
        %s241 = sand.u32 %s144, 1
        %s242 = scalar_lea.sflag [#allocation3], %s241
        %s243 = sand.u32 %s144, 1
        %s244 = smul.addr %s243, 72
        %s245 = scalar_lea.vmem [#allocation2], %s244
        %s246 = smul.u32 9, %s23
        %p247 = scmp.lt.s32.totalorder %s246, 8
        %s248 = scalar_select %p247, %s246, 8
        %s249 = smul.addr %s248, 8
        %s250 = scalar_lea.vmem %s0, %s249
        %s251 = smul.u32 9, %s23
        %s252 = smul.u32 9, %s23
        %p253 = scmp.lt.s32.totalorder %s252, 8
        %s254 = scalar_select %p253, %s252, 8
        %s255 = smul.addr %s254, 8
        %s256 = scalar_lea.vmem %s1, %s255
        %s257 = smul.u32 9, %s23
        %p258 = scmp.lt.s32.totalorder %s22, 1
        %s259 = scalar_select %p258, %s22, 1
        %s260 = smul.addr %s259, 8
        %s261 = scalar_lea.vmem %s2, %s260
        %p262 = scmp.lt.s32.totalorder %s22, 1
        %s263 = scalar_select %p262, %s22, 1
        %s264 = scalar_lea.vmem %s3, %s263
        %s265 = smul.u32 9, %s23
        %v266 = vld [vmem:[%s250] sm:$0xff]
        %v267 = vld [vmem:[%s250 + $0x8] sm:$0xff]
        %v268 = vld [vmem:[%s250 + $0x10] sm:$0xff]
        %v269 = vld [vmem:[%s250 + $0x18] sm:$0xff]
        %v270 = vld [vmem:[%s250 + $0x20] sm:$0xff]
        %v271 = vld [vmem:[%s250 + $0x28] sm:$0xff]
        %v272 = vld [vmem:[%s250 + $0x30] sm:$0xff]
        %v273 = vld [vmem:[%s250 + $0x38] sm:$0xff]
        %v274 = vld [vmem:[%s250 + $0x40] sm:$0xff]
        %v275 = vld [vmem:[%s261] sm:$0x3f]
        %vm276 = vcmask 48128
        %v278 = vsel %vm276, %v266, 0
        %v281 = vsel %vm276, %v267, 0
        %v284 = vsel %vm276, %v268, 0
        %v287 = vsel %vm276, %v269, 0
        %v290 = vsel %vm276, %v270, 0
        %v293 = vsel %vm276, %v271, 0
        %v296 = vsel %vm276, %v272, 0
        %v299 = vsel %vm276, %v273, 0
        %v302 = vsel %vm276, %v274, 0
        %vm304 = vcmask 1045504
        %v306 = vsel %vm304, %v275, 0
        %308 = vmatprep.subr.mxu0 0.0
        %309 = vmatpush1.msra.mxu0 %v306
        %310 = vmatprep.subr.mxu0 0.0
        %311 = vmatpush1.msra.mxu0 0.0
        %312 = vmatprep.subr.mxu0 0.0
        %313 = vmatpush1.msra.mxu0 0.0
        %314 = vmatprep.subr.mxu0 0.0
        %315 = vmatpush1.msra.mxu0 0.0
        %316 = vmatprep.subr.mxu0 0.0
        %317 = vmatpush1.msra.mxu0 0.0
        %318 = vmatprep.subr.mxu0 0.0
        %319 = vmatpush1.msra.mxu0 0.0
        %320 = vmatprep.subr.mxu0 0.0
        %321 = vmatpush1.msra.mxu0 0.0
        %322 = vmatprep.subr.mxu0 0.0
        %323 = vmatpush1.msra.mxu0 0.0
        %324 = vmatprep.subr.mxu0 0.0
        %325 = vmatpush1.msra.mxu0 0.0
        %326 = vmatprep.subr.mxu0 0.0
        %327 = vmatpush1.msra.mxu0 0.0
        %328 = vmatprep.subr.mxu0 0.0
        %329 = vmatpush1.msra.mxu0 0.0
        %330 = vmatprep.subr.mxu0 0.0
        %331 = vmatpush1.msra.mxu0 0.0
        %332 = vmatprep.subr.mxu0 0.0
        %333 = vmatpush1.msra.mxu0 0.0
        %334 = vmatprep.subr.mxu0 0.0
        %335 = vmatpush1.msra.mxu0 0.0
        %336 = vmatprep.subr.mxu0 0.0
        %337 = vmatpush1.msra.mxu0 0.0
        %338 = vmatprep.subr.mxu0 0.0
        %339 = vmatpush1.msra.mxu0 0.0
        %340 = vmatprep.subr.mxu0 0.0
        %341 = vmatpush1.msra.mxu0 0.0
        %342 = vmatprep.subr.mxu0 0.0
        %343 = vmatpush1.msra.mxu0 0.0
        %344 = vmatprep.subr.mxu0 0.0
        %345 = vmatpush1.msra.mxu0 0.0
        %346 = vmatprep.subr.mxu0 0.0
        %347 = vmatpush1.msra.mxu0 0.0
        %348 = vmatprep.subr.mxu0 0.0
        %349 = vmatpush1.msra.mxu0 0.0
        %350 = vmatprep.subr.mxu0 0.0
        %351 = vmatpush1.msra.mxu0 0.0
        %352 = vmatprep.subr.mxu0 0.0
        %353 = vmatpush1.msra.mxu0 0.0
        %354 = vmatprep.subr.mxu0 0.0
        %355 = vmatpush1.msra.mxu0 0.0
        %356 = vmatprep.subr.mxu0 0.0
        %357 = vmatpush1.msra.mxu0 0.0
        %358 = vmatprep.subr.mxu0 0.0
        %359 = vmatpush1.msra.mxu0 0.0
        %360 = vmatprep.subr.mxu0 0.0
        %361 = vmatpush1.msra.mxu0 0.0
        %362 = vmatprep.subr.mxu0 0.0
        %363 = vmatpush1.msra.mxu0 0.0
        %364 = vmatprep.subr.mxu0 0.0
        %365 = vmatpush1.msra.mxu0 0.0
        %366 = vmatprep.subr.mxu0 0.0
        %367 = vmatpush1.msra.mxu0 0.0
        %368 = vmatprep.subr.mxu0 0.0
        %369 = vmatpush1.msra.mxu0 0.0
        %370 = vmatprep.subr.mxu0 0.0
        %371 = vmatpush1.msra.mxu0 0.0
        %372 = vmatprep.mubr.f32.mxu0 0.0
        %373 = vmatmul.mubr.f32.gmra.mrb[0].mxu0 %v278
        %v374 = vpop.f32.mrb[0].mxu0
        %v375 = vadd.f32 0.0, %v374
        %v376 = vpop.f32.mrb[0].mxu0
        %377 = vmatprep.mubr.f32.mxu0 0.0
        %378 = vmatmul.mubr.f32.gmra.mrb[0].mxu0 %v281
        %v379 = vpop.f32.mrb[0].mxu0
        %v380 = vadd.f32 0.0, %v379
        %v381 = vpop.f32.mrb[0].mxu0
        %382 = vmatprep.mubr.f32.mxu0 0.0
        %383 = vmatmul.mubr.f32.gmra.mrb[0].mxu0 %v284
        %v384 = vpop.f32.mrb[0].mxu0
        %v385 = vadd.f32 0.0, %v384
        %v386 = vpop.f32.mrb[0].mxu0
        %387 = vmatprep.mubr.f32.mxu0 0.0
        %388 = vmatmul.mubr.f32.gmra.mrb[0].mxu0 %v287
        %v389 = vpop.f32.mrb[0].mxu0
        %v390 = vadd.f32 0.0, %v389
        %v391 = vpop.f32.mrb[0].mxu0
        %392 = vmatprep.mubr.f32.mxu0 0.0
        %393 = vmatmul.mubr.f32.gmra.mrb[0].mxu0 %v290
        %v394 = vpop.f32.mrb[0].mxu0
        %v395 = vadd.f32 0.0, %v394
        %v396 = vpop.f32.mrb[0].mxu0
        %397 = vmatprep.mubr.f32.mxu0 0.0
        %398 = vmatmul.mubr.f32.gmra.mrb[0].mxu0 %v293
        %v399 = vpop.f32.mrb[0].mxu0
        %v400 = vadd.f32 0.0, %v399
        %v401 = vpop.f32.mrb[0].mxu0
        %402 = vmatprep.mubr.f32.mxu0 0.0
        %403 = vmatmul.mubr.f32.gmra.mrb[0].mxu0 %v296
        %v404 = vpop.f32.mrb[0].mxu0
        %v405 = vadd.f32 0.0, %v404
        %v406 = vpop.f32.mrb[0].mxu0
        %407 = vmatprep.mubr.f32.mxu0 0.0
        %408 = vmatmul.mubr.f32.gmra.mrb[0].mxu0 %v299
        %v409 = vpop.f32.mrb[0].mxu0
        %v410 = vadd.f32 0.0, %v409
        %v411 = vpop.f32.mrb[0].mxu0
        %412 = vmatprep.mubr.f32.mxu0 0.0
        %413 = vmatmul.mubr.f32.gmra.mrb[0].mxu0 %v302
        %v414 = vpop.f32.mrb[0].mxu0
        %v415 = vadd.f32 0.0, %v414
        %v416 = vpop.f32.mrb[0].mxu0
        %417 = vdwg.mxu0
        %v418 = vld [vmem:[%s256] sm:$0xff]
        %v419 = vld [vmem:[%s256 + $0x8] sm:$0xff]
        %v420 = vld [vmem:[%s256 + $0x10] sm:$0xff]
        %v421 = vld [vmem:[%s256 + $0x18] sm:$0xff]
        %v422 = vld [vmem:[%s256 + $0x20] sm:$0xff]
        %v423 = vld [vmem:[%s256 + $0x28] sm:$0xff]
        %v424 = vld [vmem:[%s256 + $0x30] sm:$0xff]
        %v425 = vld [vmem:[%s256 + $0x38] sm:$0xff]
        %v426 = vld [vmem:[%s256 + $0x40] sm:$0xff]
        %428 = vset.pattern.permute.xlu0 0
        %429 = vperm.xlu0 %428, %v418
        %v430 = vpop.permute.xlu0 %429
        %433 = vset.pattern.permute.xlu0 0
        %434 = vperm.xlu0 %433, %v419
        %v435 = vpop.permute.xlu0 %434
        %438 = vset.pattern.permute.xlu0 0
        %439 = vperm.xlu0 %438, %v420
        %v440 = vpop.permute.xlu0 %439
        %443 = vset.pattern.permute.xlu0 0
        %444 = vperm.xlu0 %443, %v421
        %v445 = vpop.permute.xlu0 %444
        %448 = vset.pattern.permute.xlu0 0
        %449 = vperm.xlu0 %448, %v422
        %v450 = vpop.permute.xlu0 %449
        %453 = vset.pattern.permute.xlu0 0
        %454 = vperm.xlu0 %453, %v423
        %v455 = vpop.permute.xlu0 %454
        %458 = vset.pattern.permute.xlu0 0
        %459 = vperm.xlu0 %458, %v424
        %v460 = vpop.permute.xlu0 %459
        %463 = vset.pattern.permute.xlu0 0
        %464 = vperm.xlu0 %463, %v425
        %v465 = vpop.permute.xlu0 %464
        %468 = vset.pattern.permute.xlu0 0
        %469 = vperm.xlu0 %468, %v426
        %v470 = vpop.permute.xlu0 %469
        %v472 = vsub.f32 %v375, %v430
        %v473 = vsub.f32 %v380, %v435
        %v474 = vsub.f32 %v385, %v440
        %v475 = vsub.f32 %v390, %v445
        %v476 = vsub.f32 %v395, %v450
        %v477 = vsub.f32 %v400, %v455
        %v478 = vsub.f32 %v405, %v460
        %v479 = vsub.f32 %v410, %v465
        %v480 = vsub.f32 %v415, %v470
        %v481 = vld [vmem:[%s264] sm:$0x1]
        %v483 = vlaneseq
        %v484 = vshrl.u32 %v483, 7
        %v485 = vsub.s32 0, %v484
        %v486 = vrot.slane %v481, %v485
        %v488 = vsub.f32 %v472, %v486
        %v489 = vsub.f32 %v473, %v486
        %v490 = vsub.f32 %v474, %v486
        %v491 = vsub.f32 %v475, %v486
        %v492 = vsub.f32 %v476, %v486
        %v493 = vsub.f32 %v477, %v486
        %v494 = vsub.f32 %v478, %v486
        %v495 = vsub.f32 %v479, %v486
        %v496 = vsub.f32 %v480, %v486
        %v497 = vmin.f32 %v488, 0.0
        %v498 = vmin.f32 %v489, 0.0
        %v499 = vmin.f32 %v490, 0.0
        %v500 = vmin.f32 %v491, 0.0
        %v501 = vmin.f32 %v492, 0.0
        %v502 = vmin.f32 %v493, 0.0
        %v503 = vmin.f32 %v494, 0.0
        %v504 = vmin.f32 %v495, 0.0
        %v505 = vmin.f32 %v496, 0.0
        %v506 = vmul.f32 %v497, 1.442695
        %v507 = vpow.pop %v506
        %v508 = vmul.f32 %v498, 1.442695
        %v509 = vpow.pop %v508
        %v510 = vmul.f32 %v499, 1.442695
        %v511 = vpow.pop %v510
        %v512 = vmul.f32 %v500, 1.442695
        %v513 = vpow.pop %v512
        %v514 = vmul.f32 %v501, 1.442695
        %v515 = vpow.pop %v514
        %v516 = vmul.f32 %v502, 1.442695
        %v517 = vpow.pop %v516
        %v518 = vmul.f32 %v503, 1.442695
        %v519 = vpow.pop %v518
        %v520 = vmul.f32 %v504, 1.442695
        %v521 = vpow.pop %v520
        %v522 = vmul.f32 %v505, 1.442695
        %v523 = vpow.pop %v522
        %524 = vst [vmem:[%s245] sm:$0xff] %v507
        %525 = vst [vmem:[%s245 + $0x8] sm:$0xff] %v509
        %526 = vst [vmem:[%s245 + $0x10] sm:$0xff] %v511
        %527 = vst [vmem:[%s245 + $0x18] sm:$0xff] %v513
        %528 = vst [vmem:[%s245 + $0x20] sm:$0xff] %v515
        %529 = vst [vmem:[%s245 + $0x28] sm:$0xff] %v517
        %530 = vst [vmem:[%s245 + $0x30] sm:$0xff] %v519
        %531 = vst [vmem:[%s245 + $0x38] sm:$0xff] %v521
        %532 = vst [vmem:[%s245 + $0x40] sm:$0xff] %v523
        %s533 = sand.u32 %s144, 1
        %s534 = scalar_lea.sflag [#allocation3], %s533
        %s535 = sand.u32 %s144, 1
        %s536 = smul.addr %s535, 72
        %s537 = scalar_lea.vmem [#allocation2], %s536
        // Predicated region
        $region37: #{tpu_custom_call.1} parent=35 // pred_check
          %p538 = pneg %p154
        $region38: #{tpu_custom_call.1} parent=35 // pred_check_branch
          %540 = sbr.rel (%p538) target = $region40
        $region39: #{tpu_custom_call.1} parent=35 // pred_region
          %s541 = smul.u32 9, %s23
          %s543 = ssub.s32 1152, 1152
          %544 = vsyncadd %s534, %s543
          %s545 = smul.addr %s541, 2
          %s546 = sadd.s32 %s22, %s545
          %s547 = smul.addr %s546, 128
          %s548 = scalar_lea.hbm %s4, %s547
          %s549 = sshll.u32 %s537, 4
          %s550 = int_to_ptr.vmem [resolvable:$true] %s549
          %555 = dma.vmem_to_hbm [thread:$0]  %s550, 1152, %s548, %s534, 128, 256, 8
        $region40: #{tpu_custom_call.1} parent=35 // pred_fallthru
          _
      $region36: #{tpu_custom_call.1} parent=5 // pred_fallthru
        _
      %p556 = scmp.le.s32.totalorder 2, %s13
      // Predicated region
      $region41: #{tpu_custom_call.1} parent=5 // pred_check
        %p557 = pneg %p556
      $region42: #{tpu_custom_call.1} parent=5 // pred_check_branch
        %559 = sbr.rel (%p557) target = $region44
      $region43: #{tpu_custom_call.1} parent=5 // pred_region
        %s560 = ssub.s32 %s13, 2
        // Predicated region
        $region45: #{tpu_custom_call.1} parent=43 // pred_check
          %p561 = pneg %p160
        $region46: #{tpu_custom_call.1} parent=43 // pred_check_branch
          %563 = sbr.rel (%p561) target = $region48
        $region47: #{tpu_custom_call.1} parent=43 // pred_region
          %s564 = sand.u32 %s145, 1
          %s565 = scalar_lea.sflag [#allocation3], %s564
          %s566 = sand.u32 %s145, 1
          %s567 = smul.addr %s566, 72
          %s568 = scalar_lea.vmem [#allocation2], %s567
          %569 = dma.done %s565, 1152
        $region48: #{tpu_custom_call.1} parent=43 // pred_fallthru
          _
      $region44: #{tpu_custom_call.1} parent=5 // pred_fallthru
        _
    $region6: #{tpu_custom_call.1} parent=1 // loop_footer
      %s17 = sadd.s32 1, %s13
    $region7: #{tpu_custom_call.1} parent=1 // loop_footer_branch
      %12 = sbr.rel target = $region3
    $region8: #{tpu_custom_call.1} parent=1 // loop_exit
      _
    %570 = vsyncpa [#allocation3], 1
    %s571 = scalar_lea.sflag [#allocation3], 1
    %572 = vsyncpa %s571, 1

</llo_original>
